<compile_context>
chip_gen: v6e
topology: v6e:2x2x1
jax: 0.10.0
libtpu: 0.0.40
codegen_flags: <defaults>
</compile_context>

<pallas_src>
import functools

import jax
import jax.numpy as jnp
from jax import lax
from jax.experimental import pallas as pl
from jax.experimental.pallas import tpu as pltpu


def _round_up(x, m):
    return ((x + m - 1) // m) * m


def _vmem_capacity_bytes():
    try:
        info = pltpu.get_tpu_info()
        cap = getattr(info, "vmem_capacity_bytes", None)
        if cap:
            return int(cap)
    except Exception:
        pass
    return 64 * 1024 * 1024  # conservative default (v7x per-core VMEM)


def _test_loss_kernel(x_ref, a_ref, bm_ref, o_ref, *, inv_area, batch, bblk):
    """One batch block per grid step.

    x_ref : (bblk, C, H, W)     native-dtype input block
    a_ref : (bblk, Ho_pad, H)   f32 banded ones (height box-sum), resident
    bm_ref: (bblk, W, Wo_pad)   f32 banded ones (width box-sum), resident
    o_ref : (1, 8, 128)         f32 per-block partial max (broadcast-filled)
    """
    # |x| and channel sum on the VPU, accumulating in f32 (safe for bf16/u8
    # inputs on all generations incl. v5e, which has no bf16 VPU path).
    s = jnp.sum(jnp.abs(x_ref[...].astype(jnp.float32)), axis=1)  # (bblk, H, W)

    if batch % bblk != 0:
        # Ragged tail block: batch rows past the true batch size hold
        # unspecified VMEM contents -> zero them.  A zero slab can never beat
        # the real max since every box-sum of |x| is >= 0.
        bidx = pl.program_id(0) * bblk + lax.broadcasted_iota(
            jnp.int32, s.shape, 0)
        s = jnp.where(bidx < batch, s, 0.0)

    # Sliding box-sums as two batched banded-ones matmuls on the MXU (frees
    # VPU/XLU/vst slots; f32 operands keep exactness vs. the f32 conv).
    row = jnp.einsum("bhw,bwo->bho", s, bm_ref[...],
                     preferred_element_type=jnp.float32)        # (bblk, H, Wo_pad)
    col = jnp.einsum("boh,bhw->bow", a_ref[...], row,
                     preferred_element_type=jnp.float32)        # (bblk, Ho_pad, Wo_pad)

    mb = jnp.max(col, axis=0)                                   # (Ho_pad, Wo_pad)
    m = jnp.max(mb, axis=(0, 1), keepdims=True) * inv_area      # (1, 1)
    o_ref[...] = jnp.zeros(o_ref.shape, jnp.float32) + m


def test_loss(gen_frames, channels, ks=(16, 8), alpha=1, block_batch=None):
    """Pallas equivalent of Test_Loss.forward. Returns a scalar (f32)."""
    del alpha  # stored in the torch module but never used by forward
    b = gen_frames.shape[0]
    H, W = gen_frames.shape[-2], gen_frames.shape[-1]
    ks0, ks1 = ks

    # Keep the native dtype: DMA bf16 / fp16 / u8 as-is, upcast in-kernel.
    x = gen_frames.reshape(b, channels, H, W)

    if H < ks0 or W < ks1:
        # Rare fallback: no fully-interior window exists, so reproduce the
        # padded conv exactly (|0| contributes nothing to any window).
        x = jnp.pad(x, ((0, 0), (0, 0), (ks0, ks0), (ks1, ks1)))
        H += 2 * ks0
        W += 2 * ks1
    # else: skipping the zero-pad is exact -- any boundary-hanging window of
    # the padded conv sums a subset of some fully-interior window's |x| pixels.

    Ho, Wo = H - ks0 + 1, W - ks1 + 1
    ho_pad = _round_up(Ho, 8)      # sublane-aligned matmul output rows
    wo_pad = _round_up(Wo, 128)    # lane-dense matmul output cols

    # --- batch blocking: cdiv-based, sized against this chip's VMEM ----------
    itemsize = jnp.dtype(x.dtype).itemsize
    vmem_cap = _vmem_capacity_bytes()
    vmem_limit = min((vmem_cap * 3) // 4, 96 * 1024 * 1024)
    budget = min(vmem_limit // 2, 24 * 1024 * 1024)
    per_b = (channels * H * W * (2 * itemsize + 4)      # 2x-buffered input + f32 |x|
             + H * W * 4                                # channel-summed slab
             + H * wo_pad * 4                           # width box-sum result
             + ho_pad * wo_pad * 4                      # height box-sum result
             + 2 * (ho_pad * H + W * wo_pad) * 4)       # resident banded ops (2x buf)
    bblk = max(1, min(b, budget // per_b))
    if block_batch is not None:
        bblk = max(1, min(b, int(block_batch)))
    nb = pl.cdiv(b, bblk)
    # TODO(synk): add H-tiling with a (ks0-1) halo when even a single
    # (1, C, H, W) slab exceeds the VMEM budget (very large frames); not needed
    # for UCSD-pedestrian-sized inputs.

    # --- banded-ones operators, built once outside the kernel ----------------
    ri = jnp.arange(ho_pad, dtype=jnp.int32)[:, None]
    rj = jnp.arange(H, dtype=jnp.int32)[None, :]
    a_mat = ((rj >= ri) & (rj < ri + ks0) & (ri < Ho)).astype(jnp.float32)  # (ho_pad, H)
    ci = jnp.arange(W, dtype=jnp.int32)[:, None]
    cj = jnp.arange(wo_pad, dtype=jnp.int32)[None, :]
    b_mat = ((ci >= cj) & (ci < cj + ks1) & (cj < Wo)).astype(jnp.float32)  # (W, wo_pad)
    a_b = jnp.broadcast_to(a_mat, (bblk, ho_pad, H))
    b_b = jnp.broadcast_to(b_mat, (bblk, W, wo_pad))

    kernel = functools.partial(_test_loss_kernel,
                               inv_area=float(1.0 / (ks0 * ks1)),
                               batch=b, bblk=bblk)

    out = pl.pallas_call(
        kernel,
        out_shape=jax.ShapeDtypeStruct((nb, 8, 128), jnp.float32),
        grid=(nb,),
        in_specs=[
            pl.BlockSpec((bblk, channels, H, W), lambda i: (i, 0, 0, 0)),
            pl.BlockSpec((bblk, ho_pad, H), lambda i: (0, 0, 0)),   # resident
            pl.BlockSpec((bblk, W, wo_pad), lambda i: (0, 0, 0)),   # resident
        ],
        out_specs=pl.BlockSpec((1, 8, 128), lambda i: (i, 0, 0)),
        compiler_params=pltpu.CompilerParams(
            dimension_semantics=("parallel",),
            vmem_limit_bytes=int(vmem_limit),
        ),
    )(x, a_b, b_b)
    return jnp.max(out)


def _reference_loss(gen_frames, channels, ks=(16, 8)):
    """Pure-JAX reference mirroring the PyTorch forward exactly."""
    b = gen_frames.shape[0]
    H, W = gen_frames.shape[-2], gen_frames.shape[-1]
    x = jnp.abs(gen_frames.reshape(b, channels, H, W).astype(jnp.float32))
    xp = jnp.pad(x, ((0, 0), (0, 0), (ks[0], ks[0]), (ks[1], ks[1])))
    filt = jnp.ones((1, channels, ks[0], ks[1]), jnp.float32) / (ks[0] * ks[1])
    y = lax.conv_general_dilated(
        xp, filt, window_strides=(1, 1), padding="VALID",
        dimension_numbers=("NCHW", "OIHW", "NCHW"))
    return jnp.max(y)


if __name__ == "__main__":
    key = jax.random.PRNGKey(0)
    B, C, H, W = 2, 4, 16, 16          # small NCHW input consistent with the module
    ks = (16, 8)                       # module default kernel size

    x = jax.random.normal(key, (B, C, H, W), dtype=jnp.float32)

    # f32 input, no-pad fast path (H >= ks0, W >= ks1)
    got = jax.block_until_ready(test_loss(x, channels=C, ks=ks))
    want = jax.block_until_ready(_reference_loss(x, channels=C, ks=ks))
    assert jnp.allclose(got, want, rtol=1e-5, atol=1e-5), (got, want)

    # native bf16 input DMA'd as-is, upcast in-kernel
    x_bf16 = x.astype(jnp.bfloat16)
    got_bf = jax.block_until_ready(test_loss(x_bf16, channels=C, ks=ks))
    want_bf = jax.block_until_ready(_reference_loss(x_bf16, channels=C, ks=ks))
    assert jnp.allclose(got_bf, want_bf, rtol=1e-3, atol=1e-3), (got_bf, want_bf)

    # ragged batch: force a small batch block so the cdiv tail-masking path runs
    x3 = jax.random.normal(jax.random.PRNGKey(1), (3, C, H, W), dtype=jnp.float32)
    got_r = jax.block_until_ready(test_loss(x3, channels=C, ks=ks, block_batch=2))
    want_r = jax.block_until_ready(_reference_loss(x3, channels=C, ks=ks))
    assert jnp.allclose(got_r, want_r, rtol=1e-5, atol=1e-5), (got_r, want_r)

    # fallback path: H < ks0 forces the spatially padded variant
    x_small = jax.random.normal(key, (B, C, 8, 16), dtype=jnp.float32)
    got_s = jax.block_until_ready(test_loss(x_small, channels=C, ks=ks))
    want_s = jax.block_until_ready(_reference_loss(x_small, channels=C, ks=ks))
    assert jnp.allclose(got_s, want_s, rtol=1e-4, atol=1e-5), (got_s, want_s)

    print("KERNEL_OK")
</pallas_src>

<mosaic_0001>
module attributes {stable_mosaic.version = 11 : i64} {
  func.func @_test_loss_kernel(%arg0: i32, %arg1: memref<2x4x16x16xf32, #tpu.memory_space<vmem>>, %arg2: memref<2x8x16xf32, #tpu.memory_space<vmem>>, %arg3: memref<2x16x128xf32, #tpu.memory_space<vmem>>, %arg4: memref<1x8x128xf32, #tpu.memory_space<vmem>>) attributes {dimension_semantics = [#tpu.dimension_semantics<parallel>], iteration_bounds = array<i64: 1>, scalar_prefetch = 0 : i64, scratch_operands = 0 : i64, tpu.core_type = #tpu.core_type<tc>, window_params = [{transform_indices = @transform_0, window_bounds = array<i64: 2, 4, 16, 16>}, {pipeline_mode = #tpu.pipeline_mode<synchronous>, transform_indices = @transform_1, window_bounds = array<i64: 2, 8, 16>}, {pipeline_mode = #tpu.pipeline_mode<synchronous>, transform_indices = @transform_2, window_bounds = array<i64: 2, 16, 128>}, {transform_indices = @transform_3, window_bounds = array<i64: 1, 8, 128>}]} {
    %c0 = arith.constant 0 : index
    %c0_0 = arith.constant 0 : index
    %c0_1 = arith.constant 0 : index
    %c0_2 = arith.constant 0 : index
    %0 = vector.load %arg1[%c0, %c0_0, %c0_1, %c0_2] : memref<2x4x16x16xf32, #tpu.memory_space<vmem>>, vector<2x4x16x16xf32>
    %1 = math.absf %0 : vector<2x4x16x16xf32>
    %cst = arith.constant dense<0.000000e+00> : vector<2x16x16xf32>
    %2 = vector.multi_reduction <add>, %1, %cst [1] : vector<2x4x16x16xf32> to vector<2x16x16xf32>
    %c0_3 = arith.constant 0 : index
    %c0_4 = arith.constant 0 : index
    %c0_5 = arith.constant 0 : index
    %3 = vector.load %arg3[%c0_3, %c0_4, %c0_5] : memref<2x16x128xf32, #tpu.memory_space<vmem>>, vector<2x16x128xf32>
    "tpu.trace_start"() <{level = 10 : i32, message = "bhw,bwo->bho"}> : () -> ()
    %cst_6 = arith.constant dense<0.000000e+00> : vector<2x16x128xf32>
    %4 = tpu.matmul %2, %3, %cst_6 {dimension_numbers = #tpu.dot_dimension_numbers<[2], [1], [1], [2], [0, 0, 0, 1, 1, 2], [0], [0]>} : vector<2x16x16xf32>, vector<2x16x128xf32>, vector<2x16x128xf32> -> vector<2x16x128xf32>
    "tpu.trace_stop"() : () -> ()
    %c0_7 = arith.constant 0 : index
    %c0_8 = arith.constant 0 : index
    %c0_9 = arith.constant 0 : index
    %5 = vector.load %arg2[%c0_7, %c0_8, %c0_9] : memref<2x8x16xf32, #tpu.memory_space<vmem>>, vector<2x8x16xf32>
    "tpu.trace_start"() <{level = 10 : i32, message = "boh,bhw->bow"}> : () -> ()
    %cst_10 = arith.constant dense<0.000000e+00> : vector<2x8x128xf32>
    %6 = tpu.matmul %5, %4, %cst_10 {dimension_numbers = #tpu.dot_dimension_numbers<[2], [1], [1], [2], [0, 0, 0, 1, 1, 2], [0], [0]>} : vector<2x8x16xf32>, vector<2x16x128xf32>, vector<2x8x128xf32> -> vector<2x8x128xf32>
    "tpu.trace_stop"() : () -> ()
    %cst_11 = arith.constant dense<0xFF800000> : vector<8x128xf32>
    %7 = vector.multi_reduction <maximumf>, %6, %cst_11 [0] : vector<2x8x128xf32> to vector<8x128xf32>
    %8 = vector.shape_cast %7 : vector<8x128xf32> to vector<1x8x128xf32>
    %cst_12 = arith.constant dense<0xFF800000> : vector<1xf32>
    %9 = vector.multi_reduction <maximumf>, %8, %cst_12 [1, 2] : vector<1x8x128xf32> to vector<1xf32>
    %10 = vector.shape_cast %9 : vector<1xf32> to vector<1x1x1xf32>
    %11 = vector.extract %10[0, 0, 0] : f32 from vector<1x1x1xf32>
    %12 = vector.broadcast %11 : f32 to vector<1x1xf32>
    %cst_13 = arith.constant 7.812500e-03 : f32
    %13 = vector.broadcast %cst_13 : f32 to vector<1x1xf32>
    %14 = arith.mulf %12, %13 : vector<1x1xf32>
    %cst_14 = arith.constant 0.000000e+00 : f32
    %15 = vector.broadcast %cst_14 : f32 to vector<1x8x128xf32>
    %16 = vector.shape_cast %14 : vector<1x1xf32> to vector<1x1x1xf32>
    %17 = vector.broadcast %16 : vector<1x1x1xf32> to vector<1x8x128xf32>
    %18 = arith.addf %15, %17 : vector<1x8x128xf32>
    %c0_15 = arith.constant 0 : index
    %c0_16 = arith.constant 0 : index
    %c0_17 = arith.constant 0 : index
    %19 = vector.load %arg4[%c0_15, %c0_16, %c0_17] : memref<1x8x128xf32, #tpu.memory_space<vmem>>, vector<1x8x128xf32>
    tpu.vector_store %arg4[%c0_15, %c0_16, %c0_17], %18 {strides = array<i32>} : memref<1x8x128xf32, #tpu.memory_space<vmem>>, vector<1x8x128xf32>,
    return
  }
  func.func @transform_0(%arg0: i32) -> (i32, i32, i32, i32) {
    %c0_i32 = arith.constant 0 : i32
    %c0_i32_0 = arith.constant 0 : i32
    %c0_i32_1 = arith.constant 0 : i32
    %c0_i32_2 = arith.constant 0 : i32
    return %arg0, %c0_i32, %c0_i32_0, %c0_i32_1 : i32, i32, i32, i32
  }
  func.func @transform_1(%arg0: i32) -> (i32, i32, i32) {
    %c0_i32 = arith.constant 0 : i32
    %c0_i32_0 = arith.constant 0 : i32
    %c0_i32_1 = arith.constant 0 : i32
    %c0_i32_2 = arith.constant 0 : i32
    return %c0_i32, %c0_i32_0, %c0_i32_1 : i32, i32, i32
  }
  func.func @transform_2(%arg0: i32) -> (i32, i32, i32) {
    %c0_i32 = arith.constant 0 : i32
    %c0_i32_0 = arith.constant 0 : i32
    %c0_i32_1 = arith.constant 0 : i32
    %c0_i32_2 = arith.constant 0 : i32
    return %c0_i32, %c0_i32_0, %c0_i32_1 : i32, i32, i32
  }
  func.func @transform_3(%arg0: i32) -> (i32, i32, i32) {
    %c0_i32 = arith.constant 0 : i32
    %c0_i32_0 = arith.constant 0 : i32
    %c0_i32_1 = arith.constant 0 : i32
    return %arg0, %c0_i32, %c0_i32_0 : i32, i32, i32
  }
}

</mosaic_0001>

<llo_original>
// kernel: tpu_custom_call.1
$region0: #{tpu_custom_call.1}
  #allocation0 [shape = 'u32[]', space=smem, size = 0x4, offset = 0x4, fixed_abs, tag = 'smem constant byte address 0x4 - core index']
  #allocation1 [shape = 'u32[144,128]{1,0:T(1,128)}', space=vmem, size = 0x12000, scoped, tag = 'internal scratch']
  %s0 = inlined_call_operand.hbm [shape: f32[2,4,16,16], index: 0, kind: input, shape index: {}]
  %s1 = inlined_call_operand.hbm [shape: f32[2,8,16], index: 1, kind: input, shape index: {}]
  %s2 = inlined_call_operand.hbm [shape: f32[2,16,128], index: 2, kind: input, shape index: {}]
  %s3 = inlined_call_operand.hbm [shape: f32[1,8,128], index: 3, kind: output, shape index: {}]
  %s4 = sld [smem:[#allocation0]]
  $region34: #{tpu_custom_call.1} parent=0
    _
  %s6 = ssub.s32 1, %s4
  %s7 = scalar_select 0, %s6, %s4
  $region1: #{tpu_custom_call.1} parent=0
    #allocation2 [shape = 'u8[65536]{0}', space=vmem, size = 0x10000, scoped, tag = 'input window, operand 0, single buffered']
    #allocation3 [shape = 's32[1]{0}', space=sflag, size = 0x4, scoped, tag = 'scoped memory for tpu_custom_call.1']
    #allocation4 [shape = 's32[1]{0}', space=sflag, size = 0x4, scoped, tag = 'scoped memory for tpu_custom_call.1']
    #allocation5 [shape = 'u8[8192]{0}', space=vmem, size = 0x2000, scoped, tag = 'input window, operand 1, single buffered']
    #allocation6 [shape = 's32[1]{0}', space=sflag, size = 0x4, scoped, tag = 'scoped memory for tpu_custom_call.1']
    #allocation7 [shape = 'u8[16384]{0}', space=vmem, size = 0x4000, scoped, tag = 'input window, operand 2, single buffered']
    #allocation8 [shape = 'u8[4096]{0}', space=vmem, size = 0x1000, scoped, tag = 'output window, operand 0, single buffered']
    %8 = vsyncpa [#allocation3], 0
    %9 = vsyncpa [#allocation6], 0
    %10 = vsyncpa [#allocation4], 0
    // Predicated region
    $region2: #{tpu_custom_call.1} parent=1 // pred_check
      _
    $region3: #{tpu_custom_call.1} parent=1 // pred_check_branch
      %12 = sbr.rel (0) target = $region5
    $region4: #{tpu_custom_call.1} parent=1 // pred_region
      %s14 = ssub.s32 2048, 2048
      %15 = vsyncadd [#allocation3], %s14
      %s16 = sshll.u32 [#allocation2], 4
      %s17 = int_to_ptr.vmem [resolvable:$true] %s16
      %22 = dma.hbm_to_vmem [thread:$0]  %s0, 2048, %s17, [#allocation3], 128, 128, 8
    $region5: #{tpu_custom_call.1} parent=1 // pred_fallthru
      _
    // Predicated region
    $region6: #{tpu_custom_call.1} parent=1 // pred_check
      _
    $region7: #{tpu_custom_call.1} parent=1 // pred_check_branch
      %24 = sbr.rel (0) target = $region9
    $region8: #{tpu_custom_call.1} parent=1 // pred_region
      %s26 = ssub.s32 256, 256
      %27 = vsyncadd [#allocation6], %s26
      %s28 = sshll.u32 [#allocation5], 4
      %s29 = int_to_ptr.vmem [resolvable:$true] %s28
      %34 = dma.hbm_to_vmem [thread:$0]  %s1, 256, %s29, [#allocation6], 128, 128, 8
    $region9: #{tpu_custom_call.1} parent=1 // pred_fallthru
      _
    // Predicated region
    $region10: #{tpu_custom_call.1} parent=1 // pred_check
      _
    $region11: #{tpu_custom_call.1} parent=1 // pred_check_branch
      %36 = sbr.rel (0) target = $region13
    $region12: #{tpu_custom_call.1} parent=1 // pred_region
      %s38 = ssub.s32 512, 512
      %39 = vsyncadd [#allocation6], %s38
      %s40 = sshll.u32 [#allocation7], 4
      %s41 = int_to_ptr.vmem [resolvable:$true] %s40
      %46 = dma.hbm_to_vmem [thread:$0]  %s2, 512, %s41, [#allocation6], 128, 128, 8
    $region13: #{tpu_custom_call.1} parent=1 // pred_fallthru
      _
    // Predicated region
    $region14: #{tpu_custom_call.1} parent=1 // pred_check
      _
    $region15: #{tpu_custom_call.1} parent=1 // pred_check_branch
      %48 = sbr.rel (0) target = $region17
    $region16: #{tpu_custom_call.1} parent=1 // pred_region
      %49 = dma.done [#allocation3], 2048
    $region17: #{tpu_custom_call.1} parent=1 // pred_fallthru
      _
    // Predicated region
    $region18: #{tpu_custom_call.1} parent=1 // pred_check
      _
    $region19: #{tpu_custom_call.1} parent=1 // pred_check_branch
      %51 = sbr.rel (0) target = $region21
    $region20: #{tpu_custom_call.1} parent=1 // pred_region
      %52 = dma.done [#allocation6], 256
    $region21: #{tpu_custom_call.1} parent=1 // pred_fallthru
      _
    // Predicated region
    $region22: #{tpu_custom_call.1} parent=1 // pred_check
      _
    $region23: #{tpu_custom_call.1} parent=1 // pred_check_branch
      %54 = sbr.rel (0) target = $region25
    $region24: #{tpu_custom_call.1} parent=1 // pred_region
      %55 = dma.done [#allocation6], 512
    $region25: #{tpu_custom_call.1} parent=1 // pred_fallthru
      _
    %v56 = vld [vmem:[#allocation2] sm:$0xff]
    %v57 = vld [vmem:[#allocation2 + $0x8] sm:$0xff]
    %v58 = vld [vmem:[#allocation2 + $0x10] sm:$0xff]
    %v59 = vld [vmem:[#allocation2 + $0x18] sm:$0xff]
    %v60 = vld [vmem:[#allocation2 + $0x20] sm:$0xff]
    %v61 = vld [vmem:[#allocation2 + $0x28] sm:$0xff]
    %v62 = vld [vmem:[#allocation2 + $0x30] sm:$0xff]
    %v63 = vld [vmem:[#allocation2 + $0x38] sm:$0xff]
    %v64 = vld [vmem:[#allocation2 + $0x40] sm:$0xff]
    %v65 = vld [vmem:[#allocation2 + $0x48] sm:$0xff]
    %v66 = vld [vmem:[#allocation2 + $0x50] sm:$0xff]
    %v67 = vld [vmem:[#allocation2 + $0x58] sm:$0xff]
    %v68 = vld [vmem:[#allocation2 + $0x60] sm:$0xff]
    %v69 = vld [vmem:[#allocation2 + $0x68] sm:$0xff]
    %v70 = vld [vmem:[#allocation2 + $0x70] sm:$0xff]
    %v71 = vld [vmem:[#allocation2 + $0x78] sm:$0xff]
    %v72 = vand.u32 2147483647, %v56
    %v73 = vand.u32 2147483647, %v57
    %v74 = vand.u32 2147483647, %v58
    %v75 = vand.u32 2147483647, %v59
    %v76 = vand.u32 2147483647, %v60
    %v77 = vand.u32 2147483647, %v61
    %v78 = vand.u32 2147483647, %v62
    %v79 = vand.u32 2147483647, %v63
    %v80 = vand.u32 2147483647, %v64
    %v81 = vand.u32 2147483647, %v65
    %v82 = vand.u32 2147483647, %v66
    %v83 = vand.u32 2147483647, %v67
    %v84 = vand.u32 2147483647, %v68
    %v85 = vand.u32 2147483647, %v69
    %v86 = vand.u32 2147483647, %v70
    %v87 = vand.u32 2147483647, %v71
    %vm88 = vcmask 130048
    %v89 = vsel %vm88, %v72, 0.0
    %v90 = vsel %vm88, %v74, 0.0
    %v91 = vadd.f32 %v89, %v90
    %v92 = vsel %vm88, %v76, 0.0
    %v93 = vadd.f32 %v91, %v92
    %v94 = vsel %vm88, %v78, 0.0
    %v95 = vadd.f32 %v93, %v94
    %v96 = vsel %vm88, %v73, 0.0
    %v97 = vsel %vm88, %v75, 0.0
    %v98 = vadd.f32 %v96, %v97
    %v99 = vsel %vm88, %v77, 0.0
    %v100 = vadd.f32 %v98, %v99
    %v101 = vsel %vm88, %v79, 0.0
    %v102 = vadd.f32 %v100, %v101
    %v103 = vsel %vm88, %v80, 0.0
    %v104 = vsel %vm88, %v82, 0.0
    %v105 = vadd.f32 %v103, %v104
    %v106 = vsel %vm88, %v84, 0.0
    %v107 = vadd.f32 %v105, %v106
    %v108 = vsel %vm88, %v86, 0.0
    %v109 = vadd.f32 %v107, %v108
    %v110 = vsel %vm88, %v81, 0.0
    %v111 = vsel %vm88, %v83, 0.0
    %v112 = vadd.f32 %v110, %v111
    %v113 = vsel %vm88, %v85, 0.0
    %v114 = vadd.f32 %v112, %v113
    %v115 = vsel %vm88, %v87, 0.0
    %v116 = vadd.f32 %v114, %v115
    %v117 = vld [vmem:[#allocation7] sm:$0xff]
    %v118 = vld [vmem:[#allocation7 + $0x8] sm:$0xff]
    %v119 = vld [vmem:[#allocation7 + $0x10] sm:$0xff]
    %v120 = vld [vmem:[#allocation7 + $0x18] sm:$0xff]
    %v122 = vsel %vm88, %v95, 0
    %v125 = vsel %vm88, %v102, 0
    %127 = vmatprep.subr.mxu0 0.0
    %128 = vmatpush1.msra.mxu0 0.0
    %129 = vmatprep.subr.mxu0 0.0
    %130 = vmatpush1.msra.mxu0 0.0
    %131 = vmatprep.subr.mxu0 0.0
    %132 = vmatpush1.msra.mxu0 0.0
    %133 = vmatprep.subr.mxu0 0.0
    %134 = vmatpush1.msra.mxu0 0.0
    %135 = vmatprep.subr.mxu0 0.0
    %136 = vmatpush1.msra.mxu0 0.0
    %137 = vmatprep.subr.mxu0 0.0
    %138 = vmatpush1.msra.mxu0 0.0
    %139 = vmatprep.subr.mxu0 0.0
    %140 = vmatpush1.msra.mxu0 0.0
    %141 = vmatprep.subr.mxu0 0.0
    %142 = vmatpush1.msra.mxu0 0.0
    %143 = vmatprep.subr.mxu0 0.0
    %144 = vmatpush1.msra.mxu0 0.0
    %145 = vmatprep.subr.mxu0 0.0
    %146 = vmatpush1.msra.mxu0 0.0
    %147 = vmatprep.subr.mxu0 0.0
    %148 = vmatpush1.msra.mxu0 0.0
    %149 = vmatprep.subr.mxu0 0.0
    %150 = vmatpush1.msra.mxu0 0.0
    %151 = vmatprep.subr.mxu0 0.0
    %152 = vmatpush1.msra.mxu0 0.0
    %153 = vmatprep.subr.mxu0 0.0
    %154 = vmatpush1.msra.mxu0 0.0
    %155 = vmatprep.subr.mxu0 0.0
    %156 = vmatpush1.msra.mxu0 %v118
    %157 = vmatprep.subr.mxu0 0.0
    %158 = vmatpush1.msra.mxu0 %v117
    %159 = vmatprep.subr.mxu0 0.0
    %160 = vmatpush2.msra.mxu0 0.0
    %161 = vmatprep.subr.mxu0 0.0
    %162 = vmatpush2.msra.mxu0 0.0
    %163 = vmatprep.subr.mxu0 0.0
    %164 = vmatpush2.msra.mxu0 0.0
    %165 = vmatprep.subr.mxu0 0.0
    %166 = vmatpush2.msra.mxu0 0.0
    %167 = vmatprep.subr.mxu0 0.0
    %168 = vmatpush2.msra.mxu0 0.0
    %169 = vmatprep.subr.mxu0 0.0
    %170 = vmatpush2.msra.mxu0 0.0
    %171 = vmatprep.subr.mxu0 0.0
    %172 = vmatpush2.msra.mxu0 0.0
    %173 = vmatprep.subr.mxu0 0.0
    %174 = vmatpush2.msra.mxu0 0.0
    %175 = vmatprep.subr.mxu0 0.0
    %176 = vmatpush2.msra.mxu0 0.0
    %177 = vmatprep.subr.mxu0 0.0
    %178 = vmatpush2.msra.mxu0 0.0
    %179 = vmatprep.subr.mxu0 0.0
    %180 = vmatpush2.msra.mxu0 0.0
    %181 = vmatprep.subr.mxu0 0.0
    %182 = vmatpush2.msra.mxu0 0.0
    %183 = vmatprep.subr.mxu0 0.0
    %184 = vmatpush2.msra.mxu0 0.0
    %185 = vmatprep.subr.mxu0 0.0
    %186 = vmatpush2.msra.mxu0 0.0
    %187 = vmatprep.subr.mxu0 0.0
    %188 = vmatpush2.msra.mxu0 0.0
    %189 = vmatprep.subr.mxu0 0.0
    %190 = vmatpush2.msra.mxu0 0.0
    %191 = vmatprep.mubr.f32.mxu0 0.0
    %192 = vmatmul.mubr.f32.gmra.mxu0 %v122
    %v193 = vpop.f32.mrf.mxu0
    %v194 = vadd.f32 0.0, %v193
    %v195 = vpop.f32.mrf.mxu0
    %196 = vmatprep.mubr.f32.mxu0 0.0
    %197 = vmatmul.mubr.f32.gmra.mxu0 %v125
    %v198 = vpop.f32.mrf.mxu0
    %v199 = vadd.f32 0.0, %v198
    %v200 = vpop.f32.mrf.mxu0
    %201 = vdwg.mxu0
    %v203 = vsel %vm88, %v109, 0
    %v206 = vsel %vm88, %v116, 0
    %208 = vmatprep.subr.mxu0 0.0
    %209 = vmatpush1.msra.mxu0 0.0
    %210 = vmatprep.subr.mxu0 0.0
    %211 = vmatpush1.msra.mxu0 0.0
    %212 = vmatprep.subr.mxu0 0.0
    %213 = vmatpush1.msra.mxu0 0.0
    %214 = vmatprep.subr.mxu0 0.0
    %215 = vmatpush1.msra.mxu0 0.0
    %216 = vmatprep.subr.mxu0 0.0
    %217 = vmatpush1.msra.mxu0 0.0
    %218 = vmatprep.subr.mxu0 0.0
    %219 = vmatpush1.msra.mxu0 0.0
    %220 = vmatprep.subr.mxu0 0.0
    %221 = vmatpush1.msra.mxu0 0.0
    %222 = vmatprep.subr.mxu0 0.0
    %223 = vmatpush1.msra.mxu0 0.0
    %224 = vmatprep.subr.mxu0 0.0
    %225 = vmatpush1.msra.mxu0 0.0
    %226 = vmatprep.subr.mxu0 0.0
    %227 = vmatpush1.msra.mxu0 0.0
    %228 = vmatprep.subr.mxu0 0.0
    %229 = vmatpush1.msra.mxu0 0.0
    %230 = vmatprep.subr.mxu0 0.0
    %231 = vmatpush1.msra.mxu0 0.0
    %232 = vmatprep.subr.mxu0 0.0
    %233 = vmatpush1.msra.mxu0 0.0
    %234 = vmatprep.subr.mxu0 0.0
    %235 = vmatpush1.msra.mxu0 0.0
    %236 = vmatprep.subr.mxu0 0.0
    %237 = vmatpush1.msra.mxu0 %v120
    %238 = vmatprep.subr.mxu0 0.0
    %239 = vmatpush1.msra.mxu0 %v119
    %240 = vmatprep.subr.mxu0 0.0
    %241 = vmatpush2.msra.mxu0 0.0
    %242 = vmatprep.subr.mxu0 0.0
    %243 = vmatpush2.msra.mxu0 0.0
    %244 = vmatprep.subr.mxu0 0.0
    %245 = vmatpush2.msra.mxu0 0.0
    %246 = vmatprep.subr.mxu0 0.0
    %247 = vmatpush2.msra.mxu0 0.0
    %248 = vmatprep.subr.mxu0 0.0
    %249 = vmatpush2.msra.mxu0 0.0
    %250 = vmatprep.subr.mxu0 0.0
    %251 = vmatpush2.msra.mxu0 0.0
    %252 = vmatprep.subr.mxu0 0.0
    %253 = vmatpush2.msra.mxu0 0.0
    %254 = vmatprep.subr.mxu0 0.0
    %255 = vmatpush2.msra.mxu0 0.0
    %256 = vmatprep.subr.mxu0 0.0
    %257 = vmatpush2.msra.mxu0 0.0
    %258 = vmatprep.subr.mxu0 0.0
    %259 = vmatpush2.msra.mxu0 0.0
    %260 = vmatprep.subr.mxu0 0.0
    %261 = vmatpush2.msra.mxu0 0.0
    %262 = vmatprep.subr.mxu0 0.0
    %263 = vmatpush2.msra.mxu0 0.0
    %264 = vmatprep.subr.mxu0 0.0
    %265 = vmatpush2.msra.mxu0 0.0
    %266 = vmatprep.subr.mxu0 0.0
    %267 = vmatpush2.msra.mxu0 0.0
    %268 = vmatprep.subr.mxu0 0.0
    %269 = vmatpush2.msra.mxu0 0.0
    %270 = vmatprep.subr.mxu0 0.0
    %271 = vmatpush2.msra.mxu0 0.0
    %272 = vmatprep.mubr.f32.mxu0 0.0
    %273 = vmatmul.mubr.f32.gmra.mxu0 %v203
    %v274 = vpop.f32.mrf.mxu0
    %v275 = vadd.f32 0.0, %v274
    %v276 = vpop.f32.mrf.mxu0
    %277 = vmatprep.mubr.f32.mxu0 0.0
    %278 = vmatmul.mubr.f32.gmra.mxu0 %v206
    %v279 = vpop.f32.mrf.mxu0
    %v280 = vadd.f32 0.0, %v279
    %v281 = vpop.f32.mrf.mxu0
    %282 = vdwg.mxu0
    %v283 = vld [vmem:[#allocation5] sm:$0xff]
    %v284 = vld [vmem:[#allocation5 + $0x8] sm:$0xff]
    %v286 = vsel %vm88, %v283, 0
    %288 = vmatprep.subr.mxu0 0.0
    %289 = vmatpush1.msra.mxu0 0.0
    %290 = vmatprep.subr.mxu0 0.0
    %291 = vmatpush1.msra.mxu0 0.0
    %292 = vmatprep.subr.mxu0 0.0
    %293 = vmatpush1.msra.mxu0 0.0
    %294 = vmatprep.subr.mxu0 0.0
    %295 = vmatpush1.msra.mxu0 0.0
    %296 = vmatprep.subr.mxu0 0.0
    %297 = vmatpush1.msra.mxu0 0.0
    %298 = vmatprep.subr.mxu0 0.0
    %299 = vmatpush1.msra.mxu0 0.0
    %300 = vmatprep.subr.mxu0 0.0
    %301 = vmatpush1.msra.mxu0 0.0
    %302 = vmatprep.subr.mxu0 0.0
    %303 = vmatpush1.msra.mxu0 0.0
    %304 = vmatprep.subr.mxu0 0.0
    %305 = vmatpush1.msra.mxu0 0.0
    %306 = vmatprep.subr.mxu0 0.0
    %307 = vmatpush1.msra.mxu0 0.0
    %308 = vmatprep.subr.mxu0 0.0
    %309 = vmatpush1.msra.mxu0 0.0
    %310 = vmatprep.subr.mxu0 0.0
    %311 = vmatpush1.msra.mxu0 0.0
    %312 = vmatprep.subr.mxu0 0.0
    %313 = vmatpush1.msra.mxu0 0.0
    %314 = vmatprep.subr.mxu0 0.0
    %315 = vmatpush1.msra.mxu0 0.0
    %316 = vmatprep.subr.mxu0 0.0
    %317 = vmatpush1.msra.mxu0 %v199
    %318 = vmatprep.subr.mxu0 0.0
    %319 = vmatpush1.msra.mxu0 %v194
    %320 = vmatprep.subr.mxu0 0.0
    %321 = vmatpush2.msra.mxu0 0.0
    %322 = vmatprep.subr.mxu0 0.0
    %323 = vmatpush2.msra.mxu0 0.0
    %324 = vmatprep.subr.mxu0 0.0
    %325 = vmatpush2.msra.mxu0 0.0
    %326 = vmatprep.subr.mxu0 0.0
    %327 = vmatpush2.msra.mxu0 0.0
    %328 = vmatprep.subr.mxu0 0.0
    %329 = vmatpush2.msra.mxu0 0.0
    %330 = vmatprep.subr.mxu0 0.0
    %331 = vmatpush2.msra.mxu0 0.0
    %332 = vmatprep.subr.mxu0 0.0
    %333 = vmatpush2.msra.mxu0 0.0
    %334 = vmatprep.subr.mxu0 0.0
    %335 = vmatpush2.msra.mxu0 0.0
    %336 = vmatprep.subr.mxu0 0.0
    %337 = vmatpush2.msra.mxu0 0.0
    %338 = vmatprep.subr.mxu0 0.0
    %339 = vmatpush2.msra.mxu0 0.0
    %340 = vmatprep.subr.mxu0 0.0
    %341 = vmatpush2.msra.mxu0 0.0
    %342 = vmatprep.subr.mxu0 0.0
    %343 = vmatpush2.msra.mxu0 0.0
    %344 = vmatprep.subr.mxu0 0.0
    %345 = vmatpush2.msra.mxu0 0.0
    %346 = vmatprep.subr.mxu0 0.0
    %347 = vmatpush2.msra.mxu0 0.0
    %348 = vmatprep.subr.mxu0 0.0
    %349 = vmatpush2.msra.mxu0 0.0
    %350 = vmatprep.subr.mxu0 0.0
    %351 = vmatpush2.msra.mxu0 0.0
    %352 = vmatprep.mubr.f32.mxu0 0.0
    %353 = vmatmul.mubr.f32.gmra.mxu0 %v286
    %v354 = vpop.f32.mrf.mxu0
    %v355 = vadd.f32 0.0, %v354
    %v356 = vpop.f32.mrf.mxu0
    %357 = vdwg.mxu0
    %v359 = vsel %vm88, %v284, 0
    %361 = vmatprep.subr.mxu0 0.0
    %362 = vmatpush1.msra.mxu0 0.0
    %363 = vmatprep.subr.mxu0 0.0
    %364 = vmatpush1.msra.mxu0 0.0
    %365 = vmatprep.subr.mxu0 0.0
    %366 = vmatpush1.msra.mxu0 0.0
    %367 = vmatprep.subr.mxu0 0.0
    %368 = vmatpush1.msra.mxu0 0.0
    %369 = vmatprep.subr.mxu0 0.0
    %370 = vmatpush1.msra.mxu0 0.0
    %371 = vmatprep.subr.mxu0 0.0
    %372 = vmatpush1.msra.mxu0 0.0
    %373 = vmatprep.subr.mxu0 0.0
    %374 = vmatpush1.msra.mxu0 0.0
    %375 = vmatprep.subr.mxu0 0.0
    %376 = vmatpush1.msra.mxu0 0.0
    %377 = vmatprep.subr.mxu0 0.0
    %378 = vmatpush1.msra.mxu0 0.0
    %379 = vmatprep.subr.mxu0 0.0
    %380 = vmatpush1.msra.mxu0 0.0
    %381 = vmatprep.subr.mxu0 0.0
    %382 = vmatpush1.msra.mxu0 0.0
    %383 = vmatprep.subr.mxu0 0.0
    %384 = vmatpush1.msra.mxu0 0.0
    %385 = vmatprep.subr.mxu0 0.0
    %386 = vmatpush1.msra.mxu0 0.0
    %387 = vmatprep.subr.mxu0 0.0
    %388 = vmatpush1.msra.mxu0 0.0
    %389 = vmatprep.subr.mxu0 0.0
    %390 = vmatpush1.msra.mxu0 %v280
    %391 = vmatprep.subr.mxu0 0.0
    %392 = vmatpush1.msra.mxu0 %v275
    %393 = vmatprep.subr.mxu0 0.0
    %394 = vmatpush2.msra.mxu0 0.0
    %395 = vmatprep.subr.mxu0 0.0
    %396 = vmatpush2.msra.mxu0 0.0
    %397 = vmatprep.subr.mxu0 0.0
    %398 = vmatpush2.msra.mxu0 0.0
    %399 = vmatprep.subr.mxu0 0.0
    %400 = vmatpush2.msra.mxu0 0.0
    %401 = vmatprep.subr.mxu0 0.0
    %402 = vmatpush2.msra.mxu0 0.0
    %403 = vmatprep.subr.mxu0 0.0
    %404 = vmatpush2.msra.mxu0 0.0
    %405 = vmatprep.subr.mxu0 0.0
    %406 = vmatpush2.msra.mxu0 0.0
    %407 = vmatprep.subr.mxu0 0.0
    %408 = vmatpush2.msra.mxu0 0.0
    %409 = vmatprep.subr.mxu0 0.0
    %410 = vmatpush2.msra.mxu0 0.0
    %411 = vmatprep.subr.mxu0 0.0
    %412 = vmatpush2.msra.mxu0 0.0
    %413 = vmatprep.subr.mxu0 0.0
    %414 = vmatpush2.msra.mxu0 0.0
    %415 = vmatprep.subr.mxu0 0.0
    %416 = vmatpush2.msra.mxu0 0.0
    %417 = vmatprep.subr.mxu0 0.0
    %418 = vmatpush2.msra.mxu0 0.0
    %419 = vmatprep.subr.mxu0 0.0
    %420 = vmatpush2.msra.mxu0 0.0
    %421 = vmatprep.subr.mxu0 0.0
    %422 = vmatpush2.msra.mxu0 0.0
    %423 = vmatprep.subr.mxu0 0.0
    %424 = vmatpush2.msra.mxu0 0.0
    %425 = vmatprep.mubr.f32.mxu0 0.0
    %426 = vmatmul.mubr.f32.gmra.mxu0 %v359
    %v427 = vpop.f32.mrf.mxu0
    %v428 = vadd.f32 0.0, %v427
    %v429 = vpop.f32.mrf.mxu0
    %430 = vdwg.mxu0
    %v431 = vmax.f32 %v355, %v428
    %432 = vmax.xlane.f32.xlu0 %v431
    %v433 = vpop.xlane.xlu0 %432
    %v434 = vrot.slane %v433, 4
    %v435 = vmax.f32 %v433, %v434
    %v436 = vrot.slane %v435, 2
    %v437 = vmax.f32 %v435, %v436
    %v438 = vrot.slane %v437, 1
    %v439 = vmax.f32 %v437, %v438
    %s440 = vtos %v439
    %v441 = vstv %s440
    %v442 = vmul.f32 %v441, 0.0078125
    %v443 = vadd.f32 %v442, 0.0
    %444 = vst [vmem:[#allocation8] sm:$0xff] %v443
    // Predicated region
    $region26: #{tpu_custom_call.1} parent=1 // pred_check
      _
    $region27: #{tpu_custom_call.1} parent=1 // pred_check_branch
      %446 = sbr.rel (0) target = $region29
    $region28: #{tpu_custom_call.1} parent=1 // pred_region
      %s448 = ssub.s32 128, 128
      %449 = vsyncadd [#allocation4], %s448
      %s451 = sshll.u32 [#allocation8], 4
      %s452 = int_to_ptr.vmem [resolvable:$true] %s451
      %454 = dma.vmem_to_hbm [thread:$0]  %s452, 128, %s3, [#allocation4]
    $region29: #{tpu_custom_call.1} parent=1 // pred_fallthru
      _
    // Predicated region
    $region30: #{tpu_custom_call.1} parent=1 // pred_check
      _
    $region31: #{tpu_custom_call.1} parent=1 // pred_check_branch
      %456 = sbr.rel (0) target = $region33
    $region32: #{tpu_custom_call.1} parent=1 // pred_region
      %457 = dma.done [#allocation4], 128
    $region33: #{tpu_custom_call.1} parent=1 // pred_fallthru
      _
    %458 = vsyncpa [#allocation3], 1
    %459 = vsyncpa [#allocation6], 1
    %460 = vsyncpa [#allocation4], 1

</llo_original>
